<compile_context>
chip_gen: v6e
topology: v6e:2x2x1
jax: 0.10.0
libtpu: 0.0.40
codegen_flags: <defaults>
</compile_context>

<pallas_src>
import jax
import jax.numpy as jnp
from jax.experimental import pallas as pl
from jax.experimental.pallas import tpu as pltpu

D_IN, D_HID, D_OUT = 36, 72, 36
HID_PAD = 128  # hidden width padded to a full lane dim (weights only, VMEM-resident)


def ddqn_kernel(x_ref, w1_ref, b1_ref, w2_ref, b2_ref, w3_ref, b3_ref, o_ref):
    # layer1 + relu: bf16 matmul, f32 accumulate, f32 bias/ReLU
    x = x_ref[...].astype(jnp.bfloat16)                               # (tb, 36)
    h1 = jnp.dot(x, w1_ref[...], preferred_element_type=jnp.float32) + b1_ref[...]
    h1 = jnp.maximum(h1, 0.0)                                         # (tb, 128) f32

    # layer2 + relu
    h2 = jnp.dot(h1.astype(jnp.bfloat16), w2_ref[...],
                 preferred_element_type=jnp.float32) + b2_ref[...]
    h2 = jnp.maximum(h2, 0.0)                                         # (tb, 128) f32

    # layer3 + relu (output relu, as in the PyTorch forward)
    h3 = jnp.dot(h2.astype(jnp.bfloat16), w3_ref[...],
                 preferred_element_type=jnp.float32) + b3_ref[...]
    o_ref[...] = jnp.maximum(h3, 0.0)                                 # (tb, 36) f32


def _round_up(n, m):
    return ((n + m - 1) // m) * m


def _num_tensorcores():
    """Best-effort TC count of the local device (2 on v7x, 1 on v5e/v6e)."""
    try:
        return max(1, int(getattr(jax.devices()[0], "num_cores", 1)))
    except Exception:
        return 1


def _pick_tb(batch, n_cores=1):
    """Batch tile: one fat step on single-TC chips, balanced even grid on v7x."""
    if batch <= 8:
        return batch                       # tiny: full-array sublane dim is legal
    cap = 4096                             # (4096,128) f32 tiles double-buffered ~ a few MB
    if n_cores <= 1 and batch <= cap:
        return _round_up(batch, 16)        # single grid step, no per-step overhead
    # multi-TC (v7x) or very large batch: grid length a multiple of the TC count
    steps = max(n_cores, pl.cdiv(batch, cap))
    steps = _round_up(steps, max(1, n_cores))
    return min(cap, _round_up(pl.cdiv(batch, steps), 16))


def prepare_params(params):
    """One-time weight/bias padding + bf16 cast (hoisted out of the call path).

    Weights [in, out] are zero-padded so the hidden dim is 128 lanes wide and
    cast to bf16 (MXU inputs); biases stay f32 (bias/ReLU run on the f32
    accumulator).  Padded lanes are exact zeros, so results are unchanged.
    """
    def padw(w, rows, cols):
        r, c = w.shape
        w = jnp.asarray(w, jnp.float32)
        return jnp.pad(w, ((0, rows - r), (0, cols - c))).astype(jnp.bfloat16)

    def padb(b, cols):
        b = jnp.asarray(b, jnp.float32).reshape(1, -1)
        return jnp.pad(b, ((0, 0), (0, cols - b.shape[1])))

    return {
        "w1": padw(params["w1"], D_IN, HID_PAD),      # (36, 128) bf16
        "b1": padb(params["b1"], HID_PAD),            # (1, 128)  f32
        "w2": padw(params["w2"], HID_PAD, HID_PAD),   # (128, 128) bf16
        "b2": padb(params["b2"], HID_PAD),            # (1, 128)  f32
        "w3": padw(params["w3"], HID_PAD, D_OUT),     # (128, 36) bf16
        "b3": padb(params["b3"], D_OUT),              # (1, 36)   f32
    }


def ddqn_forward(x, prepared, *, tb=None):
    """x: (B, 36) float32; prepared: output of prepare_params()."""
    B, d_in = x.shape
    assert d_in == D_IN
    if tb is None:
        tb = _pick_tb(B, _num_tensorcores())

    grid = (pl.cdiv(B, tb),)

    return pl.pallas_call(
        ddqn_kernel,
        out_shape=jax.ShapeDtypeStruct((B, D_OUT), jnp.float32),
        grid_spec=pltpu.PrefetchScalarGridSpec(
            num_scalar_prefetch=0,
            grid=grid,
            in_specs=[
                pl.BlockSpec((tb, D_IN), lambda i: (i, 0)),          # x tile (streamed, 36 lanes)
                pl.BlockSpec((D_IN, HID_PAD), lambda i: (0, 0)),     # w1 (VMEM-resident)
                pl.BlockSpec((1, HID_PAD), lambda i: (0, 0)),        # b1
                pl.BlockSpec((HID_PAD, HID_PAD), lambda i: (0, 0)),  # w2
                pl.BlockSpec((1, HID_PAD), lambda i: (0, 0)),        # b2
                pl.BlockSpec((HID_PAD, D_OUT), lambda i: (0, 0)),    # w3
                pl.BlockSpec((1, D_OUT), lambda i: (0, 0)),          # b3
            ],
            out_specs=pl.BlockSpec((tb, D_OUT), lambda i: (i, 0)),   # out tile (36 lanes)
        ),
        compiler_params=pltpu.CompilerParams(
            dimension_semantics=("parallel",),
        ),
    )(x.astype(jnp.float32),
      prepared["w1"], prepared["b1"],
      prepared["w2"], prepared["b2"],
      prepared["w3"], prepared["b3"])


def init_params(key):
    """Deterministic init mirroring nn.Linear shapes (stored as [in, out])."""
    k1, k2, k3, k4, k5, k6 = jax.random.split(key, 6)

    def uniform(k, shape, fan_in):
        bound = 1.0 / jnp.sqrt(fan_in)
        return jax.random.uniform(k, shape, jnp.float32, -bound, bound)

    return {
        "w1": uniform(k1, (D_IN, D_HID), float(D_IN)),
        "b1": uniform(k2, (D_HID,), float(D_IN)),
        "w2": uniform(k3, (D_HID, D_HID), float(D_HID)),
        "b2": uniform(k4, (D_HID,), float(D_HID)),
        "w3": uniform(k5, (D_HID, D_OUT), float(D_HID)),
        "b3": uniform(k6, (D_OUT,), float(D_HID)),
    }


def ddqn_reference(x, params):
    h1 = jnp.maximum(x @ params["w1"] + params["b1"], 0.0)
    h2 = jnp.maximum(h1 @ params["w2"] + params["b2"], 0.0)
    return jnp.maximum(h2 @ params["w3"] + params["b3"], 0.0)


if __name__ == "__main__":
    key = jax.random.PRNGKey(0)
    k_params, k_x = jax.random.split(key)

    params = init_params(k_params)
    prepared = prepare_params(params)   # one-time pad + cast (not per call)

    B = 16
    x = jax.random.normal(k_x, (B, D_IN), dtype=jnp.float32)

    out = ddqn_forward(x, prepared)
    out = jax.block_until_ready(out)

    ref = ddqn_reference(x, params)     # full f32 reference
    assert out.shape == (B, D_OUT)
    # bf16 matmul inputs + f32 accumulation -> loose-but-safe tolerance vs f32 ref
    assert jnp.allclose(out, ref, atol=5e-2, rtol=5e-2), \
        f"max abs diff {jnp.max(jnp.abs(out - ref))}"

    print("KERNEL_OK")
</pallas_src>

<mosaic_0001>
module attributes {stable_mosaic.version = 11 : i64} {
  func.func @ddqn_kernel(%arg0: i32, %arg1: memref<16x36xf32, #tpu.memory_space<vmem>>, %arg2: memref<36x128xbf16, #tpu.memory_space<vmem>>, %arg3: memref<1x128xf32, #tpu.memory_space<vmem>>, %arg4: memref<128x128xbf16, #tpu.memory_space<vmem>>, %arg5: memref<1x128xf32, #tpu.memory_space<vmem>>, %arg6: memref<128x36xbf16, #tpu.memory_space<vmem>>, %arg7: memref<1x36xf32, #tpu.memory_space<vmem>>, %arg8: memref<16x36xf32, #tpu.memory_space<vmem>>) attributes {dimension_semantics = [#tpu.dimension_semantics<parallel>], iteration_bounds = array<i64: 1>, scalar_prefetch = 0 : i64, scratch_operands = 0 : i64, tpu.core_type = #tpu.core_type<tc>, window_params = [{transform_indices = @transform_0, window_bounds = array<i64: 16, 36>}, {pipeline_mode = #tpu.pipeline_mode<synchronous>, transform_indices = @transform_1, window_bounds = array<i64: 36, 128>}, {pipeline_mode = #tpu.pipeline_mode<synchronous>, transform_indices = @transform_2, window_bounds = array<i64: 1, 128>}, {pipeline_mode = #tpu.pipeline_mode<synchronous>, transform_indices = @transform_3, window_bounds = array<i64: 128, 128>}, {pipeline_mode = #tpu.pipeline_mode<synchronous>, transform_indices = @transform_4, window_bounds = array<i64: 1, 128>}, {pipeline_mode = #tpu.pipeline_mode<synchronous>, transform_indices = @transform_5, window_bounds = array<i64: 128, 36>}, {pipeline_mode = #tpu.pipeline_mode<synchronous>, transform_indices = @transform_6, window_bounds = array<i64: 1, 36>}, {transform_indices = @transform_7, window_bounds = array<i64: 16, 36>}]} {
    %c0 = arith.constant 0 : index
    %c0_0 = arith.constant 0 : index
    %0 = vector.load %arg1[%c0, %c0_0] : memref<16x36xf32, #tpu.memory_space<vmem>>, vector<16x36xf32>
    %1 = arith.truncf %0 : vector<16x36xf32> to vector<16x36xbf16>
    %c0_1 = arith.constant 0 : index
    %c0_2 = arith.constant 0 : index
    %2 = vector.load %arg2[%c0_1, %c0_2] : memref<36x128xbf16, #tpu.memory_space<vmem>>, vector<36x128xbf16>
    %cst = arith.constant dense<0.000000e+00> : vector<16x128xf32>
    %3 = tpu.matmul %1, %2, %cst {dimension_numbers = #tpu.dot_dimension_numbers<[1], [0], [0], [1], [0, 0, 1, 1], [], []>} : vector<16x36xbf16>, vector<36x128xbf16>, vector<16x128xf32> -> vector<16x128xf32>
    %c0_3 = arith.constant 0 : index
    %c0_4 = arith.constant 0 : index
    %4 = vector.load %arg3[%c0_3, %c0_4] : memref<1x128xf32, #tpu.memory_space<vmem>>, vector<1x128xf32>
    %5 = vector.broadcast %4 : vector<1x128xf32> to vector<16x128xf32>
    %6 = arith.addf %3, %5 : vector<16x128xf32>
    %cst_5 = arith.constant 0.000000e+00 : f32
    %7 = vector.broadcast %cst_5 : f32 to vector<16x128xf32>
    %8 = arith.maximumf %6, %7 : vector<16x128xf32>
    %9 = arith.truncf %8 : vector<16x128xf32> to vector<16x128xbf16>
    %c0_6 = arith.constant 0 : index
    %c0_7 = arith.constant 0 : index
    %10 = vector.load %arg4[%c0_6, %c0_7] : memref<128x128xbf16, #tpu.memory_space<vmem>>, vector<128x128xbf16>
    %cst_8 = arith.constant dense<0.000000e+00> : vector<16x128xf32>
    %11 = tpu.matmul %9, %10, %cst_8 {dimension_numbers = #tpu.dot_dimension_numbers<[1], [0], [0], [1], [0, 0, 1, 1], [], []>} : vector<16x128xbf16>, vector<128x128xbf16>, vector<16x128xf32> -> vector<16x128xf32>
    %c0_9 = arith.constant 0 : index
    %c0_10 = arith.constant 0 : index
    %12 = vector.load %arg5[%c0_9, %c0_10] : memref<1x128xf32, #tpu.memory_space<vmem>>, vector<1x128xf32>
    %13 = vector.broadcast %12 : vector<1x128xf32> to vector<16x128xf32>
    %14 = arith.addf %11, %13 : vector<16x128xf32>
    %cst_11 = arith.constant 0.000000e+00 : f32
    %15 = vector.broadcast %cst_11 : f32 to vector<16x128xf32>
    %16 = arith.maximumf %14, %15 : vector<16x128xf32>
    %17 = arith.truncf %16 : vector<16x128xf32> to vector<16x128xbf16>
    %c0_12 = arith.constant 0 : index
    %c0_13 = arith.constant 0 : index
    %18 = vector.load %arg6[%c0_12, %c0_13] : memref<128x36xbf16, #tpu.memory_space<vmem>>, vector<128x36xbf16>
    %cst_14 = arith.constant dense<0.000000e+00> : vector<16x36xf32>
    %19 = tpu.matmul %17, %18, %cst_14 {dimension_numbers = #tpu.dot_dimension_numbers<[1], [0], [0], [1], [0, 0, 1, 1], [], []>} : vector<16x128xbf16>, vector<128x36xbf16>, vector<16x36xf32> -> vector<16x36xf32>
    %c0_15 = arith.constant 0 : index
    %c0_16 = arith.constant 0 : index
    %20 = vector.load %arg7[%c0_15, %c0_16] : memref<1x36xf32, #tpu.memory_space<vmem>>, vector<1x36xf32>
    %21 = vector.broadcast %20 : vector<1x36xf32> to vector<16x36xf32>
    %22 = arith.addf %19, %21 : vector<16x36xf32>
    %cst_17 = arith.constant 0.000000e+00 : f32
    %23 = vector.broadcast %cst_17 : f32 to vector<16x36xf32>
    %24 = arith.maximumf %22, %23 : vector<16x36xf32>
    %c0_18 = arith.constant 0 : index
    %c0_19 = arith.constant 0 : index
    %25 = vector.load %arg8[%c0_18, %c0_19] : memref<16x36xf32, #tpu.memory_space<vmem>>, vector<16x36xf32>
    tpu.vector_store %arg8[%c0_18, %c0_19], %24 {strides = array<i32>} : memref<16x36xf32, #tpu.memory_space<vmem>>, vector<16x36xf32>,
    return
  }
  func.func @transform_0(%arg0: i32) -> (i32, i32) {
    %c0_i32 = arith.constant 0 : i32
    %c0_i32_0 = arith.constant 0 : i32
    return %arg0, %c0_i32 : i32, i32
  }
  func.func @transform_1(%arg0: i32) -> (i32, i32) {
    %c0_i32 = arith.constant 0 : i32
    %c0_i32_0 = arith.constant 0 : i32
    %c0_i32_1 = arith.constant 0 : i32
    return %c0_i32, %c0_i32_0 : i32, i32
  }
  func.func @transform_2(%arg0: i32) -> (i32, i32) {
    %c0_i32 = arith.constant 0 : i32
    %c0_i32_0 = arith.constant 0 : i32
    %c0_i32_1 = arith.constant 0 : i32
    return %c0_i32, %c0_i32_0 : i32, i32
  }
  func.func @transform_3(%arg0: i32) -> (i32, i32) {
    %c0_i32 = arith.constant 0 : i32
    %c0_i32_0 = arith.constant 0 : i32
    %c0_i32_1 = arith.constant 0 : i32
    return %c0_i32, %c0_i32_0 : i32, i32
  }
  func.func @transform_4(%arg0: i32) -> (i32, i32) {
    %c0_i32 = arith.constant 0 : i32
    %c0_i32_0 = arith.constant 0 : i32
    %c0_i32_1 = arith.constant 0 : i32
    return %c0_i32, %c0_i32_0 : i32, i32
  }
  func.func @transform_5(%arg0: i32) -> (i32, i32) {
    %c0_i32 = arith.constant 0 : i32
    %c0_i32_0 = arith.constant 0 : i32
    %c0_i32_1 = arith.constant 0 : i32
    return %c0_i32, %c0_i32_0 : i32, i32
  }
  func.func @transform_6(%arg0: i32) -> (i32, i32) {
    %c0_i32 = arith.constant 0 : i32
    %c0_i32_0 = arith.constant 0 : i32
    %c0_i32_1 = arith.constant 0 : i32
    return %c0_i32, %c0_i32_0 : i32, i32
  }
  func.func @transform_7(%arg0: i32) -> (i32, i32) {
    %c0_i32 = arith.constant 0 : i32
    %c0_i32_0 = arith.constant 0 : i32
    return %arg0, %c0_i32 : i32, i32
  }
}

</mosaic_0001>

<llo_original>
// kernel: tpu_custom_call.1
$region0: #{tpu_custom_call.1}
  #allocation0 [shape = 'u32[]', space=smem, size = 0x4, offset = 0x4, fixed_abs, tag = 'smem constant byte address 0x4 - core index']
  #allocation1 [shape = 'u32[144,128]{1,0:T(1,128)}', space=vmem, size = 0x12000, scoped, tag = 'internal scratch']
  %s0 = inlined_call_operand.hbm [shape: f32[16,36], index: 0, kind: input, shape index: {}]
  %s1 = inlined_call_operand.vmem [shape: bf16[36,128], index: 1, kind: input, shape index: {}]
  %s2 = inlined_call_operand.vmem [shape: f32[1,128], index: 2, kind: input, shape index: {}]
  %s3 = inlined_call_operand.vmem [shape: bf16[128,128], index: 3, kind: input, shape index: {}]
  %s4 = inlined_call_operand.vmem [shape: f32[1,128], index: 4, kind: input, shape index: {}]
  %s5 = inlined_call_operand.vmem [shape: bf16[128,36], index: 5, kind: input, shape index: {}]
  %s6 = inlined_call_operand.vmem [shape: f32[1,36], index: 6, kind: input, shape index: {}]
  %s7 = inlined_call_operand.hbm [shape: f32[16,36], index: 7, kind: output, shape index: {}]
  %s8 = sld [smem:[#allocation0]]
  $region42: #{tpu_custom_call.1} parent=0
    _
  %s10 = ssub.s32 1, %s8
  %s11 = scalar_select 0, %s10, %s8
  $region1: #{tpu_custom_call.1} parent=0
    #allocation2 [shape = 'u8[8192]{0}', space=vmem, size = 0x2000, scoped, tag = 'input window, operand 0, single buffered']
    #allocation3 [shape = 's32[1]{0}', space=sflag, size = 0x4, scoped, tag = 'scoped memory for tpu_custom_call.1']
    #allocation4 [shape = 's32[1]{0}', space=sflag, size = 0x4, scoped, tag = 'scoped memory for tpu_custom_call.1']
    #allocation5 [shape = 'u8[8192]{0}', space=vmem, size = 0x2000, scoped, tag = 'output window, operand 0, single buffered']
    %12 = vsyncpa [#allocation3], 0
    %13 = vsyncpa [#allocation4], 0
    // Predicated region
    $region2: #{tpu_custom_call.1} parent=1 // pred_check
      _
    $region3: #{tpu_custom_call.1} parent=1 // pred_check_branch
      %15 = sbr.rel (0) target = $region5
    $region4: #{tpu_custom_call.1} parent=1 // pred_region
      %s17 = ssub.s32 256, 256
      %18 = vsyncadd [#allocation3], %s17
      %s19 = sshll.u32 [#allocation2], 4
      %s20 = int_to_ptr.vmem [resolvable:$true] %s19
      %25 = dma.hbm_to_vmem [thread:$0]  %s0, 256, %s20, [#allocation3], 128, 128, 8
    $region5: #{tpu_custom_call.1} parent=1 // pred_fallthru
      _
    // Predicated region
    $region6: #{tpu_custom_call.1} parent=1 // pred_check
      _
    $region7: #{tpu_custom_call.1} parent=1 // pred_check_branch
      %27 = sbr.rel (0) target = $region9
    $region8: #{tpu_custom_call.1} parent=1 // pred_region
      _
    $region9: #{tpu_custom_call.1} parent=1 // pred_fallthru
      _
    // Predicated region
    $region10: #{tpu_custom_call.1} parent=1 // pred_check
      _
    $region11: #{tpu_custom_call.1} parent=1 // pred_check_branch
      %29 = sbr.rel (0) target = $region13
    $region12: #{tpu_custom_call.1} parent=1 // pred_region
      _
    $region13: #{tpu_custom_call.1} parent=1 // pred_fallthru
      _
    // Predicated region
    $region14: #{tpu_custom_call.1} parent=1 // pred_check
      _
    $region15: #{tpu_custom_call.1} parent=1 // pred_check_branch
      %31 = sbr.rel (0) target = $region17
    $region16: #{tpu_custom_call.1} parent=1 // pred_region
      _
    $region17: #{tpu_custom_call.1} parent=1 // pred_fallthru
      _
    // Predicated region
    $region18: #{tpu_custom_call.1} parent=1 // pred_check
      _
    $region19: #{tpu_custom_call.1} parent=1 // pred_check_branch
      %33 = sbr.rel (0) target = $region21
    $region20: #{tpu_custom_call.1} parent=1 // pred_region
      _
    $region21: #{tpu_custom_call.1} parent=1 // pred_fallthru
      _
    // Predicated region
    $region22: #{tpu_custom_call.1} parent=1 // pred_check
      _
    $region23: #{tpu_custom_call.1} parent=1 // pred_check_branch
      %35 = sbr.rel (0) target = $region25
    $region24: #{tpu_custom_call.1} parent=1 // pred_region
      _
    $region25: #{tpu_custom_call.1} parent=1 // pred_fallthru
      _
    // Predicated region
    $region26: #{tpu_custom_call.1} parent=1 // pred_check
      _
    $region27: #{tpu_custom_call.1} parent=1 // pred_check_branch
      %37 = sbr.rel (0) target = $region29
    $region28: #{tpu_custom_call.1} parent=1 // pred_region
      _
    $region29: #{tpu_custom_call.1} parent=1 // pred_fallthru
      _
    // Predicated region
    $region30: #{tpu_custom_call.1} parent=1 // pred_check
      _
    $region31: #{tpu_custom_call.1} parent=1 // pred_check_branch
      %39 = sbr.rel (0) target = $region33
    $region32: #{tpu_custom_call.1} parent=1 // pred_region
      %40 = dma.done [#allocation3], 256
    $region33: #{tpu_custom_call.1} parent=1 // pred_fallthru
      _
    %v42 = vld [vmem:[#allocation2] sm:$0xff]
    %v43 = vld [vmem:[#allocation2 + $0x8] sm:$0xff]
    %v44 = vpack.c.bf16 %v43, %v42
    %v45 = vld [vmem:[%s1] sm:$0xf]
    %v46 = vld [vmem:[%s1 + $0x4] sm:$0xf]
    %v47 = vld [vmem:[%s1 + $0x8] sm:$0xf]
    %v48 = vld [vmem:[%s1 + $0xc] sm:$0xf]
    %v49 = vld [vmem:[%s1 + $0x10] sm:$0x3]
    %v50 = vld [vmem:[%s2] sm:$0x1]
    %v52 = vlaneseq
    %v53 = vshrl.u32 %v52, 7
    %v54 = vsub.s32 0, %v53
    %v55 = vrot.slane %v50, %v54
    %v62 = vunpack.c.l.b16 %v45
    %v63 = vunpack.c.l.b16 %v46
    %v64 = vunpack.c.l.b16 %v47
    %v65 = vunpack.c.l.b16 %v48
    %v66 = vunpack.c.l.b16 %v49
    %v67 = vpack.c.b16 %v63, %v62
    %v68 = vpack.c.b16 %v65, %v64
    %v69 = vpack.c.b16 %v66, %v66
    %vm72 = vcmask 293888
    %v74 = vsel %vm72, %v44, 0
    %vm76 = vcmask 1041408
    %v78 = vsel %vm76, %v69, 0
    %80 = vmatprep.subr.bf16.mxu0 0
    %81 = vmatpush1.bf16.msra.mxu0 0
    %82 = vmatprep.subr.bf16.mxu0 0
    %83 = vmatpush1.bf16.msra.mxu0 0
    %84 = vmatprep.subr.bf16.mxu0 0
    %85 = vmatpush1.bf16.msra.mxu0 0
    %86 = vmatprep.subr.bf16.mxu0 0
    %87 = vmatpush1.bf16.msra.mxu0 0
    %88 = vmatprep.subr.bf16.mxu0 0
    %89 = vmatpush1.bf16.msra.mxu0 0
    %90 = vmatprep.subr.bf16.mxu0 0
    %91 = vmatpush1.bf16.msra.mxu0 %v78
    %92 = vmatprep.subr.bf16.mxu0 0
    %93 = vmatpush1.bf16.msra.mxu0 %v68
    %94 = vmatprep.subr.bf16.mxu0 0
    %95 = vmatpush1.bf16.msra.mxu0 %v67
    %96 = vmatprep.subr.bf16.mxu0 0
    %97 = vmatpush2.bf16.msra.mxu0 0
    %98 = vmatprep.subr.bf16.mxu0 0
    %99 = vmatpush2.bf16.msra.mxu0 0
    %100 = vmatprep.subr.bf16.mxu0 0
    %101 = vmatpush2.bf16.msra.mxu0 0
    %102 = vmatprep.subr.bf16.mxu0 0
    %103 = vmatpush2.bf16.msra.mxu0 0
    %104 = vmatprep.subr.bf16.mxu0 0
    %105 = vmatpush2.bf16.msra.mxu0 0
    %106 = vmatprep.subr.bf16.mxu0 0
    %107 = vmatpush2.bf16.msra.mxu0 0
    %108 = vmatprep.subr.bf16.mxu0 0
    %109 = vmatpush2.bf16.msra.mxu0 0
    %110 = vmatprep.subr.bf16.mxu0 0
    %111 = vmatpush2.bf16.msra.mxu0 0
    %112 = vmatprep.mubr.bf16.mxu0 0
    %113 = vmatmul.mubr.bf16.gmra.mxu0 %v74
    %v114 = vpop.f32.mrf.mxu0
    %v115 = vadd.f32 %v55, %v114
    %v116 = vpop.f32.mrf.mxu0
    %v117 = vpop.f32.mrf.mxu0
    %v118 = vadd.f32 %v55, %v117
    %v119 = vpop.f32.mrf.mxu0
    %120 = vdwg.mxu0
    %v121 = vmax.f32 %v115, 0.0
    %v122 = vmax.f32 %v118, 0.0
    %v123 = vpack.c.bf16 %v122, %v121
    %v124 = vld [vmem:[%s3] sm:$0xf]
    %v125 = vld [vmem:[%s3 + $0x4] sm:$0xf]
    %v126 = vld [vmem:[%s3 + $0x8] sm:$0xf]
    %v127 = vld [vmem:[%s3 + $0xc] sm:$0xf]
    %v128 = vld [vmem:[%s3 + $0x10] sm:$0xf]
    %v129 = vld [vmem:[%s3 + $0x14] sm:$0xf]
    %v130 = vld [vmem:[%s3 + $0x18] sm:$0xf]
    %v131 = vld [vmem:[%s3 + $0x1c] sm:$0xf]
    %v132 = vld [vmem:[%s3 + $0x20] sm:$0xf]
    %v133 = vld [vmem:[%s3 + $0x24] sm:$0xf]
    %v134 = vld [vmem:[%s3 + $0x28] sm:$0xf]
    %v135 = vld [vmem:[%s3 + $0x2c] sm:$0xf]
    %v136 = vld [vmem:[%s3 + $0x30] sm:$0xf]
    %v137 = vld [vmem:[%s3 + $0x34] sm:$0xf]
    %v138 = vld [vmem:[%s3 + $0x38] sm:$0xf]
    %v139 = vld [vmem:[%s3 + $0x3c] sm:$0xf]
    %v140 = vld [vmem:[%s4] sm:$0x1]
    %v142 = vlaneseq
    %v143 = vshrl.u32 %v142, 7
    %v144 = vsub.s32 0, %v143
    %v145 = vrot.slane %v140, %v144
    %v163 = vunpack.c.l.b16 %v124
    %v164 = vunpack.c.l.b16 %v125
    %v165 = vunpack.c.l.b16 %v126
    %v166 = vunpack.c.l.b16 %v127
    %v167 = vunpack.c.l.b16 %v128
    %v168 = vunpack.c.l.b16 %v129
    %v169 = vunpack.c.l.b16 %v130
    %v170 = vunpack.c.l.b16 %v131
    %v171 = vunpack.c.l.b16 %v132
    %v172 = vunpack.c.l.b16 %v133
    %v173 = vunpack.c.l.b16 %v134
    %v174 = vunpack.c.l.b16 %v135
    %v175 = vunpack.c.l.b16 %v136
    %v176 = vunpack.c.l.b16 %v137
    %v177 = vunpack.c.l.b16 %v138
    %v178 = vunpack.c.l.b16 %v139
    %v179 = vpack.c.b16 %v164, %v163
    %v180 = vpack.c.b16 %v166, %v165
    %v181 = vpack.c.b16 %v168, %v167
    %v182 = vpack.c.b16 %v170, %v169
    %v183 = vpack.c.b16 %v172, %v171
    %v184 = vpack.c.b16 %v174, %v173
    %v185 = vpack.c.b16 %v176, %v175
    %v186 = vpack.c.b16 %v178, %v177
    %195 = vmatprep.subr.bf16.mxu0 0
    %196 = vmatpush1.bf16.msra.mxu0 %v186
    %197 = vmatprep.subr.bf16.mxu0 0
    %198 = vmatpush1.bf16.msra.mxu0 %v185
    %199 = vmatprep.subr.bf16.mxu0 0
    %200 = vmatpush1.bf16.msra.mxu0 %v184
    %201 = vmatprep.subr.bf16.mxu0 0
    %202 = vmatpush1.bf16.msra.mxu0 %v183
    %203 = vmatprep.subr.bf16.mxu0 0
    %204 = vmatpush1.bf16.msra.mxu0 %v182
    %205 = vmatprep.subr.bf16.mxu0 0
    %206 = vmatpush1.bf16.msra.mxu0 %v181
    %207 = vmatprep.subr.bf16.mxu0 0
    %208 = vmatpush1.bf16.msra.mxu0 %v180
    %209 = vmatprep.subr.bf16.mxu0 0
    %210 = vmatpush1.bf16.msra.mxu0 %v179
    %211 = vmatprep.subr.bf16.mxu0 0
    %212 = vmatpush2.bf16.msra.mxu0 0
    %213 = vmatprep.subr.bf16.mxu0 0
    %214 = vmatpush2.bf16.msra.mxu0 0
    %215 = vmatprep.subr.bf16.mxu0 0
    %216 = vmatpush2.bf16.msra.mxu0 0
    %217 = vmatprep.subr.bf16.mxu0 0
    %218 = vmatpush2.bf16.msra.mxu0 0
    %219 = vmatprep.subr.bf16.mxu0 0
    %220 = vmatpush2.bf16.msra.mxu0 0
    %221 = vmatprep.subr.bf16.mxu0 0
    %222 = vmatpush2.bf16.msra.mxu0 0
    %223 = vmatprep.subr.bf16.mxu0 0
    %224 = vmatpush2.bf16.msra.mxu0 0
    %225 = vmatprep.subr.bf16.mxu0 0
    %226 = vmatpush2.bf16.msra.mxu0 0
    %227 = vmatprep.mubr.bf16.mxu0 0
    %228 = vmatmul.mubr.bf16.gmra.mxu0 %v123
    %v229 = vpop.f32.mrf.mxu0
    %v230 = vadd.f32 %v145, %v229
    %v231 = vpop.f32.mrf.mxu0
    %v232 = vpop.f32.mrf.mxu0
    %v233 = vadd.f32 %v145, %v232
    %v234 = vpop.f32.mrf.mxu0
    %235 = vdwg.mxu0
    %v236 = vmax.f32 %v230, 0.0
    %v237 = vmax.f32 %v233, 0.0
    %v238 = vpack.c.bf16 %v237, %v236
    %v239 = vld [vmem:[%s5] sm:$0xf]
    %v240 = vld [vmem:[%s5 + $0x4] sm:$0xf]
    %v241 = vld [vmem:[%s5 + $0x8] sm:$0xf]
    %v242 = vld [vmem:[%s5 + $0xc] sm:$0xf]
    %v243 = vld [vmem:[%s5 + $0x10] sm:$0xf]
    %v244 = vld [vmem:[%s5 + $0x14] sm:$0xf]
    %v245 = vld [vmem:[%s5 + $0x18] sm:$0xf]
    %v246 = vld [vmem:[%s5 + $0x1c] sm:$0xf]
    %v247 = vld [vmem:[%s5 + $0x20] sm:$0xf]
    %v248 = vld [vmem:[%s5 + $0x24] sm:$0xf]
    %v249 = vld [vmem:[%s5 + $0x28] sm:$0xf]
    %v250 = vld [vmem:[%s5 + $0x2c] sm:$0xf]
    %v251 = vld [vmem:[%s5 + $0x30] sm:$0xf]
    %v252 = vld [vmem:[%s5 + $0x34] sm:$0xf]
    %v253 = vld [vmem:[%s5 + $0x38] sm:$0xf]
    %v254 = vld [vmem:[%s5 + $0x3c] sm:$0xf]
    %v255 = vld [vmem:[%s6] sm:$0x1]
    %v257 = vlaneseq
    %v258 = vshrl.u32 %v257, 7
    %v259 = vsub.s32 0, %v258
    %v260 = vrot.slane %v255, %v259
    %v278 = vunpack.c.l.b16 %v239
    %v279 = vunpack.c.l.b16 %v240
    %v280 = vunpack.c.l.b16 %v241
    %v281 = vunpack.c.l.b16 %v242
    %v282 = vunpack.c.l.b16 %v243
    %v283 = vunpack.c.l.b16 %v244
    %v284 = vunpack.c.l.b16 %v245
    %v285 = vunpack.c.l.b16 %v246
    %v286 = vunpack.c.l.b16 %v247
    %v287 = vunpack.c.l.b16 %v248
    %v288 = vunpack.c.l.b16 %v249
    %v289 = vunpack.c.l.b16 %v250
    %v290 = vunpack.c.l.b16 %v251
    %v291 = vunpack.c.l.b16 %v252
    %v292 = vunpack.c.l.b16 %v253
    %v293 = vunpack.c.l.b16 %v254
    %v294 = vpack.c.b16 %v279, %v278
    %v295 = vpack.c.b16 %v281, %v280
    %v296 = vpack.c.b16 %v283, %v282
    %v297 = vpack.c.b16 %v285, %v284
    %v298 = vpack.c.b16 %v287, %v286
    %v299 = vpack.c.b16 %v289, %v288
    %v300 = vpack.c.b16 %v291, %v290
    %v301 = vpack.c.b16 %v293, %v292
    %310 = vmatprep.subr.bf16.mxu0 0
    %311 = vmatpush1.bf16.msra.mxu0 %v301
    %312 = vmatprep.subr.bf16.mxu0 0
    %313 = vmatpush1.bf16.msra.mxu0 %v300
    %314 = vmatprep.subr.bf16.mxu0 0
    %315 = vmatpush1.bf16.msra.mxu0 %v299
    %316 = vmatprep.subr.bf16.mxu0 0
    %317 = vmatpush1.bf16.msra.mxu0 %v298
    %318 = vmatprep.subr.bf16.mxu0 0
    %319 = vmatpush1.bf16.msra.mxu0 %v297
    %320 = vmatprep.subr.bf16.mxu0 0
    %321 = vmatpush1.bf16.msra.mxu0 %v296
    %322 = vmatprep.subr.bf16.mxu0 0
    %323 = vmatpush1.bf16.msra.mxu0 %v295
    %324 = vmatprep.subr.bf16.mxu0 0
    %325 = vmatpush1.bf16.msra.mxu0 %v294
    %326 = vmatprep.subr.bf16.mxu0 0
    %327 = vmatpush2.bf16.msra.mxu0 0
    %328 = vmatprep.subr.bf16.mxu0 0
    %329 = vmatpush2.bf16.msra.mxu0 0
    %330 = vmatprep.subr.bf16.mxu0 0
    %331 = vmatpush2.bf16.msra.mxu0 0
    %332 = vmatprep.subr.bf16.mxu0 0
    %333 = vmatpush2.bf16.msra.mxu0 0
    %334 = vmatprep.subr.bf16.mxu0 0
    %335 = vmatpush2.bf16.msra.mxu0 0
    %336 = vmatprep.subr.bf16.mxu0 0
    %337 = vmatpush2.bf16.msra.mxu0 0
    %338 = vmatprep.subr.bf16.mxu0 0
    %339 = vmatpush2.bf16.msra.mxu0 0
    %340 = vmatprep.subr.bf16.mxu0 0
    %341 = vmatpush2.bf16.msra.mxu0 0
    %342 = vmatprep.mubr.bf16.mxu0 0
    %343 = vmatmul.mubr.bf16.gmra.mxu0 %v238
    %v344 = vpop.f32.mrf.mxu0
    %v345 = vadd.f32 %v260, %v344
    %v346 = vpop.f32.mrf.mxu0
    %v347 = vpop.f32.mrf.mxu0
    %v348 = vadd.f32 %v260, %v347
    %v349 = vpop.f32.mrf.mxu0
    %350 = vdwg.mxu0
    %v351 = vmax.f32 %v345, 0.0
    %v352 = vmax.f32 %v348, 0.0
    %353 = vst.msk [vmem:[#allocation5] sm:$0xff] %vm72, %v351
    %354 = vst.msk [vmem:[#allocation5 + $0x8] sm:$0xff] %vm72, %v352
    // Predicated region
    $region34: #{tpu_custom_call.1} parent=1 // pred_check
      _
    $region35: #{tpu_custom_call.1} parent=1 // pred_check_branch
      %356 = sbr.rel (0) target = $region37
    $region36: #{tpu_custom_call.1} parent=1 // pred_region
      %s358 = ssub.s32 256, 256
      %359 = vsyncadd [#allocation4], %s358
      %s360 = sshll.u32 [#allocation5], 4
      %s361 = int_to_ptr.vmem [resolvable:$true] %s360
      %366 = dma.vmem_to_hbm [thread:$0]  %s361, 256, %s7, [#allocation4], 128, 128, 8
    $region37: #{tpu_custom_call.1} parent=1 // pred_fallthru
      _
    // Predicated region
    $region38: #{tpu_custom_call.1} parent=1 // pred_check
      _
    $region39: #{tpu_custom_call.1} parent=1 // pred_check_branch
      %368 = sbr.rel (0) target = $region41
    $region40: #{tpu_custom_call.1} parent=1 // pred_region
      %369 = dma.done [#allocation4], 256
    $region41: #{tpu_custom_call.1} parent=1 // pred_fallthru
      _
    %370 = vsyncpa [#allocation3], 1
    %371 = vsyncpa [#allocation4], 1

</llo_original>
